<compile_context>
chip_gen: v7x
topology: tpu7x:2x2x1
jax: 0.10.0
libtpu: 0.0.40
codegen_flags: <defaults>
</compile_context>

<pallas_src>
import functools

import jax
import jax.numpy as jnp
from jax.experimental import pallas as pl
from jax.experimental.pallas import tpu as pltpu

_MIB = 1024 * 1024


def _ada_ln_out_kernel(mult_ref, shift_ref, x_ref, o_ref, *, eps, h_true):
    # mult_ref/shift_ref: (B, Hp) f32, whole-array blocks (constant index_map).
    # x_ref/o_ref:        (tS, Hp) tile of batch row pl.program_id(0).
    b = pl.program_id(0)
    x = x_ref[...].astype(jnp.float32)                            # (tS, Hp)
    # sum/h_true == mean over the TRUE hidden size (padded lanes are zero).
    var = jnp.sum(x * x, axis=-1, keepdims=True) * (1.0 / h_true)  # (tS, 1)
    inv = jax.lax.rsqrt(var + eps)                                 # (tS, 1)
    mult = mult_ref[pl.ds(b, 1), :]                                # (1, Hp)
    shift = shift_ref[pl.ds(b, 1), :]                              # (1, Hp)
    o_ref[...] = ((x * inv) * mult + shift).astype(o_ref.dtype)


def _vmem_capacity_bytes():
    try:
        return int(pltpu.get_tpu_info().vmem_capacity_bytes)
    except Exception:
        return 64 * _MIB  # conservative (v7x-sized) fallback


def _pick_seq_tile(S, Hp, itemsize, *, vmem_budget, step_bytes=8 * _MIB):
    """Byte-based sequence tile: ~step_bytes of (in+out) HBM traffic per grid step,
    capped so double-buffered in/out tiles plus two live f32 temps fit `vmem_budget`,
    rounded to a multiple of 8. Never larger than S (ragged last tile via cdiv)."""
    ts_traffic = step_bytes // max(2 * Hp * itemsize, 1)
    bytes_per_row = Hp * (4 * itemsize + 8)  # 2x(in+out) buffers + 2 f32 temps
    ts_vmem = vmem_budget // max(bytes_per_row, 1)
    ts = int(min(ts_traffic, ts_vmem))
    ts = max(8, (ts // 8) * 8)
    return min(ts, S)


def ada_layer_norm_out(x, emb, linear_w, linear_b, norm_w, *, eps=1e-6, seq_tile=None):
    """x: (B, S, H); emb: (B, H); linear_w: (2H, H) [PyTorch layout];
    linear_b: (2H,); norm_w: (H,)."""
    B, S, H = x.shape

    # --- Hoisted adaLN projection (tiny matmul; XLA handles it fine) -------------
    e = emb.astype(jnp.float32)
    e = e * jax.nn.sigmoid(e)                                           # SiLU
    proj = e @ linear_w.astype(jnp.float32).T + linear_b.astype(jnp.float32)  # (B, 2H)
    scale, shift = proj[:, :H], proj[:, H:]
    mult = (1.0 + norm_w.astype(jnp.float32))[None, :] * (1.0 + scale)  # (B, H) f32
    shift = shift.astype(jnp.float32)                                   # (B, H) f32

    # --- Lane-dense last dim: pad H to a multiple of 128 if needed ---------------
    Hp = max(128, ((H + 127) // 128) * 128)
    if Hp != H:
        pad = Hp - H
        x_in = jnp.pad(x, ((0, 0), (0, 0), (0, pad)))
        mult = jnp.pad(mult, ((0, 0), (0, pad)))
        shift = jnp.pad(shift, ((0, 0), (0, pad)))
    else:
        x_in = x

    # --- Chip-aware VMEM budget and byte-based tile ------------------------------
    vmem_cap = _vmem_capacity_bytes()                     # 64 MiB v7x, 128 MiB v5e/v6e
    vmem_limit = max(32 * _MIB, min(vmem_cap - 12 * _MIB, 100 * _MIB))
    if seq_tile is None:
        tS = _pick_seq_tile(S, Hp, x.dtype.itemsize, vmem_budget=vmem_limit - 8 * _MIB)
    else:
        tS = min(int(seq_tile), S)
    grid = (B, pl.cdiv(S, tS))  # ragged last tile handled by Pallas

    kernel = functools.partial(_ada_ln_out_kernel, eps=eps, h_true=H)

    out = pl.pallas_call(
        kernel,
        out_shape=jax.ShapeDtypeStruct((B, S, Hp), x.dtype),
        grid=grid,
        in_specs=[
            # Full (B, Hp) blocks, constant index_map -> DMA'd once, reused all steps.
            pl.BlockSpec((B, Hp), lambda b, s: (0, 0)),                       # mult
            pl.BlockSpec((B, Hp), lambda b, s: (0, 0)),                       # shift
            pl.BlockSpec((pl.Squeezed(), tS, Hp), lambda b, s: (b, s, 0)),    # x
        ],
        out_specs=pl.BlockSpec((pl.Squeezed(), tS, Hp), lambda b, s: (b, s, 0)),
        compiler_params=pltpu.CompilerParams(
            dimension_semantics=("parallel", "parallel"),
            vmem_limit_bytes=int(vmem_limit),
        ),
    )(mult, shift, x_in)

    return out[..., :H] if Hp != H else out


def _reference(x, emb, linear_w, linear_b, norm_w, eps=1e-6):
    e = emb.astype(jnp.float32)
    e = e * jax.nn.sigmoid(e)
    proj = e @ linear_w.astype(jnp.float32).T + linear_b.astype(jnp.float32)
    H = x.shape[-1]
    scale, shift = proj[:, :H], proj[:, H:]
    xf = x.astype(jnp.float32)
    xn = xf * jax.lax.rsqrt(jnp.mean(xf * xf, axis=-1, keepdims=True) + eps)
    xn = xn * (1.0 + norm_w.astype(jnp.float32))
    out = xn * (1.0 + scale)[:, None, :] + shift[:, None, :]
    return out.astype(x.dtype)


if __name__ == "__main__":
    eps = 1e-6
    key = jax.random.PRNGKey(0)

    # --- Test 1: small module-consistent shapes (B=2, S=8, H=32) -----------------
    B, S, H = 2, 8, 32
    k1, k2, k3, k4, key = jax.random.split(key, 5)
    x = jax.random.normal(k1, (B, S, H), dtype=jnp.float32)
    emb = jax.random.normal(k2, (B, H), dtype=jnp.float32)
    linear_w = jax.random.normal(k3, (2 * H, H), dtype=jnp.float32) * 0.02
    linear_b = jax.random.normal(k4, (2 * H,), dtype=jnp.float32) * 0.02
    norm_w = jnp.zeros((H,), dtype=jnp.float32)  # GemmaRMSNorm weight init = zeros

    out = jax.block_until_ready(ada_layer_norm_out(x, emb, linear_w, linear_b, norm_w, eps=eps))
    ref = _reference(x, emb, linear_w, linear_b, norm_w, eps=eps)
    assert out.shape == (B, S, H)
    assert jnp.allclose(out, ref, atol=1e-5, rtol=1e-5)

    # --- Test 2: ragged sequence tiling + H padding + dynamic batch index --------
    B2, S2, H2 = 2, 40, 96  # S2 not a multiple of tile; H2 padded to 128
    k1, k2, k3, k4, k5, key = jax.random.split(key, 6)
    x2 = jax.random.normal(k1, (B2, S2, H2), dtype=jnp.float32)
    emb2 = jax.random.normal(k2, (B2, H2), dtype=jnp.float32)
    lw2 = jax.random.normal(k3, (2 * H2, H2), dtype=jnp.float32) * 0.02
    lb2 = jax.random.normal(k4, (2 * H2,), dtype=jnp.float32) * 0.02
    nw2 = jax.random.normal(k5, (H2,), dtype=jnp.float32) * 0.1

    out2 = jax.block_until_ready(
        ada_layer_norm_out(x2, emb2, lw2, lb2, nw2, eps=eps, seq_tile=16))
    ref2 = _reference(x2, emb2, lw2, lb2, nw2, eps=eps)
    assert out2.shape == (B2, S2, H2)
    assert jnp.allclose(out2, ref2, atol=1e-5, rtol=1e-5)

    print("KERNEL_OK")
</pallas_src>

<mosaic_0001>
module attributes {stable_mosaic.version = 11 : i64} {
  func.func @_ada_ln_out_kernel(%arg0: i32, %arg1: i32, %arg2: memref<2x128xf32, #tpu.memory_space<vmem>>, %arg3: memref<2x128xf32, #tpu.memory_space<vmem>>, %arg4: memref<1x8x128xf32, #tpu.memory_space<vmem>>, %arg5: memref<1x8x128xf32, #tpu.memory_space<vmem>>) attributes {dimension_semantics = [#tpu.dimension_semantics<parallel>, #tpu.dimension_semantics<parallel>], iteration_bounds = array<i64: 2, 1>, scalar_prefetch = 0 : i64, scratch_operands = 0 : i64, tpu.core_type = #tpu.core_type<tc>, window_params = [{pipeline_mode = #tpu.pipeline_mode<synchronous>, transform_indices = @transform_0, window_bounds = array<i64: 2, 128>}, {pipeline_mode = #tpu.pipeline_mode<synchronous>, transform_indices = @transform_1, window_bounds = array<i64: 2, 128>}, {transform_indices = @transform_2, window_bounds = array<i64: 1, 8, 128>}, {transform_indices = @transform_3, window_bounds = array<i64: 1, 8, 128>}]} {
    %c0 = arith.constant 0 : index
    %c0_0 = arith.constant 0 : index
    %c0_1 = arith.constant 0 : index
    %0 = vector.load %arg4[%c0, %c0_0, %c0_1] : memref<1x8x128xf32, #tpu.memory_space<vmem>>, vector<1x8x128xf32>
    %1 = vector.shape_cast %0 : vector<1x8x128xf32> to vector<8x128xf32>
    %2 = arith.mulf %1, %1 : vector<8x128xf32>
    %cst = arith.constant dense<0.000000e+00> : vector<8xf32>
    %3 = vector.multi_reduction <add>, %2, %cst [1] : vector<8x128xf32> to vector<8xf32>
    %4 = vector.shape_cast %3 : vector<8xf32> to vector<8x1xf32>
    %cst_2 = arith.constant 3.125000e-02 : f32
    %5 = vector.broadcast %cst_2 : f32 to vector<8x1xf32>
    %6 = arith.mulf %4, %5 : vector<8x1xf32>
    %cst_3 = arith.constant 9.99999997E-7 : f32
    %7 = vector.broadcast %cst_3 : f32 to vector<8x1xf32>
    %8 = arith.addf %6, %7 : vector<8x1xf32>
    %9 = math.rsqrt %8 : vector<8x1xf32>
    %10 = arith.index_cast %arg0 : i32 to index
    %c0_4 = arith.constant 0 : index
    %11 = vector.load %arg2[%10, %c0_4] : memref<2x128xf32, #tpu.memory_space<vmem>>, vector<1x128xf32>
    %12 = arith.index_cast %arg0 : i32 to index
    %c0_5 = arith.constant 0 : index
    %13 = vector.load %arg3[%12, %c0_5] : memref<2x128xf32, #tpu.memory_space<vmem>>, vector<1x128xf32>
    %14 = vector.broadcast %9 : vector<8x1xf32> to vector<8x128xf32>
    %15 = arith.mulf %1, %14 : vector<8x128xf32>
    %16 = vector.broadcast %11 : vector<1x128xf32> to vector<8x128xf32>
    %17 = arith.mulf %15, %16 : vector<8x128xf32>
    %18 = vector.broadcast %13 : vector<1x128xf32> to vector<8x128xf32>
    %19 = arith.addf %17, %18 : vector<8x128xf32>
    %c0_6 = arith.constant 0 : index
    %c0_7 = arith.constant 0 : index
    %c0_8 = arith.constant 0 : index
    %20 = vector.load %arg5[%c0_6, %c0_7, %c0_8] : memref<1x8x128xf32, #tpu.memory_space<vmem>>, vector<1x8x128xf32>
    %21 = vector.shape_cast %20 : vector<1x8x128xf32> to vector<8x128xf32>
    %22 = vector.shape_cast %19 : vector<8x128xf32> to vector<1x8x128xf32>
    tpu.vector_store %arg5[%c0_6, %c0_7, %c0_8], %22 {strides = array<i32>} : memref<1x8x128xf32, #tpu.memory_space<vmem>>, vector<1x8x128xf32>,
    return
  }
  func.func @transform_0(%arg0: i32, %arg1: i32) -> (i32, i32) {
    %c0_i32 = arith.constant 0 : i32
    %c0_i32_0 = arith.constant 0 : i32
    %c0_i32_1 = arith.constant 0 : i32
    return %c0_i32, %c0_i32_0 : i32, i32
  }
  func.func @transform_1(%arg0: i32, %arg1: i32) -> (i32, i32) {
    %c0_i32 = arith.constant 0 : i32
    %c0_i32_0 = arith.constant 0 : i32
    %c0_i32_1 = arith.constant 0 : i32
    return %c0_i32, %c0_i32_0 : i32, i32
  }
  func.func @transform_2(%arg0: i32, %arg1: i32) -> (i32, i32, i32) {
    %c0_i32 = arith.constant 0 : i32
    %c0_i32_0 = arith.constant 0 : i32
    return %arg0, %arg1, %c0_i32 : i32, i32, i32
  }
  func.func @transform_3(%arg0: i32, %arg1: i32) -> (i32, i32, i32) {
    %c0_i32 = arith.constant 0 : i32
    %c0_i32_0 = arith.constant 0 : i32
    return %arg0, %arg1, %c0_i32 : i32, i32, i32
  }
}

</mosaic_0001>

<llo_original>
// kernel: tpu_custom_call.1
$region0: #{tpu_custom_call.1}
  #allocation0 [shape = 'u32[]', space=smem, size = 0x4, offset = 0x4, fixed_abs, tag = 'smem constant byte address 0x4 - core index']
  #allocation1 [shape = 'u32[144,128]{1,0:T(1,128)}', space=vmem, size = 0x12000, scoped, tag = 'internal scratch']
  %s0 = inlined_call_operand.hbm [shape: f32[2,128], index: 0, kind: input, shape index: {}]
  %s1 = inlined_call_operand.vmem [shape: f32[2,128], index: 1, kind: input, shape index: {}]
  %s2 = inlined_call_operand.hbm [shape: f32[2,8,128], index: 2, kind: input, shape index: {}]
  %s3 = inlined_call_operand.hbm [shape: f32[2,8,128], index: 3, kind: output, shape index: {}]
  %s4 = sld [smem:[#allocation0]]
  $region53: #{tpu_custom_call.1} parent=0
    _
  %s6 = ssub.s32 1, %s4
  %s7 = scalar_select 0, %s6, %s4
  $region1: #{tpu_custom_call.1} parent=0
    #allocation2 [shape = 'u8[1024]{0}', space=vmem, size = 0x400, scoped, tag = 'input window, operand 0, single buffered']
    #allocation3 [shape = 's32[2]{0}', space=sflag, size = 0x8, scoped, tag = 'scoped memory for tpu_custom_call.1']
    #allocation4 [shape = 's32[2]{0}', space=sflag, size = 0x8, scoped, tag = 'scoped memory for tpu_custom_call.1']
    #allocation5 [shape = 'u8[8192]{0}', space=vmem, size = 0x2000, scoped, tag = 'input window, operand 2']
    #allocation6 [shape = 's32[2]{0}', space=sflag, size = 0x8, scoped, tag = 'scoped memory for tpu_custom_call.1']
    #allocation7 [shape = 'u8[8192]{0}', space=vmem, size = 0x2000, scoped, tag = 'output window, operand 0']
    %8 = vsyncpa [#allocation3], 0
    %9 = vsyncpa [#allocation6], 0
    %s10 = scalar_lea.sflag [#allocation6], 1
    %11 = vsyncpa %s10, 0
    %12 = vsyncpa [#allocation4], 0
    %s13 = scalar_lea.sflag [#allocation4], 1
    %14 = vsyncpa %s13, 0
    loop: start=0, step=1, limit=4
    $region2: #{tpu_custom_call.1} parent=1 // loop_pre_header
      _
    $region3: #{tpu_custom_call.1} parent=1 // loop_header
      %s16 = sphi 0, %s20
      %p17 = scmp.ge.s32.totalorder %s16, 4
      %s23 = sphi 0, %s35
      %s24 = sphi 0, %s31
      %s25 = sphi 0, %s23
      %s26 = sphi 0, %s24
      %s27 = sphi 0, %s25
      %s28 = sphi 0, %s26
      %s36 = sphi 0, %s36
      %s38 = sphi 0, %s36
      %s39 = sphi 0, %s38
      %s53 = sphi 0, %s39
      %s57 = sphi 0, %s57
      %s59 = sphi 0, %s57
      %s60 = sphi 0, %s59
      %s74 = sphi 0, %s60
      %s82 = sphi 0, %s84
      %s85 = sphi 0, %s82
      %s86 = sphi 0, %s85
      %s102 = sphi 0, %s86
      %s110 = sphi 0, %s112
      %s113 = sphi 0, %s110
      %s114 = sphi 0, %s113
      %s130 = sphi 0, %s114
    $region4: #{tpu_custom_call.1} parent=1 // loop_header_branch
      %19 = sbr.rel (%p17) target = $region8
    $region5: #{tpu_custom_call.1} parent=1 // loop_body
      %s21 = ssub.s32 %s16, 1
      %s22 = ssub.s32 %s16, 2
      %s29 = sadd.s32 1, %s24
      %p30 = scmp.ge.s32.totalorder %s29, 1
      %s31 = scalar_select %p30, 0, %s29
      %s32 = sadd.s32 1, %s23
      %s33 = scalar_select %p30, %s32, %s23
      %p34 = scmp.ge.s32.totalorder %s33, 2
      %s35 = scalar_select %p34, 0, %s33
      %s37 = sadd.s32 %s36, 1
      %p40 = scmp.eq.s32.totalorder %s16, 1
      %p41 = scmp.ne.s32.totalorder %s36, %s38
      %p42 = scmp.eq.s32.totalorder %s16, 0
      %p43 = por %p41, %p42
      %p44 = scmp.ne.s32.totalorder %s36, %s38
      %p45 = scmp.eq.s32.totalorder %s21, 1
      %p46 = por %p44, %p45
      %p47 = scmp.ne.s32.totalorder %s38, %s39
      %p48 = scmp.eq.s32.totalorder %s21, 0
      %p49 = por %p47, %p48
      %p50 = scmp.ne.s32.totalorder %s38, %s39
      %p51 = scmp.eq.s32.totalorder %s22, 1
      %p52 = por %p50, %p51
      %p54 = scmp.ne.s32.totalorder %s39, %s53
      %p55 = scmp.eq.s32.totalorder %s22, 0
      %p56 = por %p54, %p55
      %s58 = sadd.s32 %s57, 1
      %p61 = scmp.eq.s32.totalorder %s16, 1
      %p62 = scmp.ne.s32.totalorder %s57, %s59
      %p63 = scmp.eq.s32.totalorder %s16, 0
      %p64 = por %p62, %p63
      %p65 = scmp.ne.s32.totalorder %s57, %s59
      %p66 = scmp.eq.s32.totalorder %s21, 1
      %p67 = por %p65, %p66
      %p68 = scmp.ne.s32.totalorder %s59, %s60
      %p69 = scmp.eq.s32.totalorder %s21, 0
      %p70 = por %p68, %p69
      %p71 = scmp.ne.s32.totalorder %s59, %s60
      %p72 = scmp.eq.s32.totalorder %s22, 1
      %p73 = por %p71, %p72
      %p75 = scmp.ne.s32.totalorder %s60, %s74
      %p76 = scmp.eq.s32.totalorder %s22, 0
      %p77 = por %p75, %p76
      %s78 = ssub.s32 %s23, %s35
      %s79 = ssub.s32 %s24, %s31
      %s80 = sor.u32 %s78, %s79
      %p81 = scmp.eq.s32.totalorder %s80, 0
      %s83 = sadd.s32 %s82, 1
      %s84 = scalar_select %p81, %s82, %s83
      %p87 = pneg %p81
      %p88 = scmp.eq.s32.totalorder %s16, 1
      %p89 = por %p87, %p88
      %p90 = scmp.ne.s32.totalorder %s82, %s85
      %p91 = scmp.eq.s32.totalorder %s16, 0
      %p92 = por %p90, %p91
      %p93 = scmp.ne.s32.totalorder %s82, %s85
      %p94 = scmp.eq.s32.totalorder %s21, 1
      %p95 = por %p93, %p94
      %p96 = scmp.ne.s32.totalorder %s85, %s86
      %p97 = scmp.eq.s32.totalorder %s21, 0
      %p98 = por %p96, %p97
      %p99 = scmp.ne.s32.totalorder %s85, %s86
      %p100 = scmp.eq.s32.totalorder %s22, 1
      %p101 = por %p99, %p100
      %p103 = scmp.ne.s32.totalorder %s86, %s102
      %p104 = scmp.eq.s32.totalorder %s22, 0
      %p105 = por %p103, %p104
      %s106 = ssub.s32 %s23, %s35
      %s107 = ssub.s32 %s24, %s31
      %s108 = sor.u32 %s106, %s107
      %p109 = scmp.eq.s32.totalorder %s108, 0
      %s111 = sadd.s32 %s110, 1
      %s112 = scalar_select %p109, %s110, %s111
      %p115 = pneg %p109
      %p116 = scmp.eq.s32.totalorder %s16, 1
      %p117 = por %p115, %p116
      %p118 = scmp.ne.s32.totalorder %s110, %s113
      %p119 = scmp.eq.s32.totalorder %s16, 0
      %p120 = por %p118, %p119
      %p121 = scmp.ne.s32.totalorder %s110, %s113
      %p122 = scmp.eq.s32.totalorder %s21, 1
      %p123 = por %p121, %p122
      %p124 = scmp.ne.s32.totalorder %s113, %s114
      %p125 = scmp.eq.s32.totalorder %s21, 0
      %p126 = por %p124, %p125
      %p127 = scmp.ne.s32.totalorder %s113, %s114
      %p128 = scmp.eq.s32.totalorder %s22, 1
      %p129 = por %p127, %p128
      %p131 = scmp.ne.s32.totalorder %s114, %s130
      %p132 = scmp.eq.s32.totalorder %s22, 0
      %p133 = por %p131, %p132
      %p134 = scmp.le.s32.totalorder 1, %s16
      %p135 = scmp.lt.s32.totalorder %s16, 3
      %p136 = pnand %p134, %p135
      %p137 = pneg %p136
      // Predicated region
      $region9: #{tpu_custom_call.1} parent=5 // pred_check
        _
      $region10: #{tpu_custom_call.1} parent=5 // pred_check_branch
        %139 = sbr.rel (%p136) target = $region12
      $region11: #{tpu_custom_call.1} parent=5 // pred_region
        %s140 = ssub.s32 %s16, 1
        // Predicated region
        $region13: #{tpu_custom_call.1} parent=11 // pred_check
          %p141 = pneg %p49
        $region14: #{tpu_custom_call.1} parent=11 // pred_check_branch
          %143 = sbr.rel (%p141) target = $region16
        $region15: #{tpu_custom_call.1} parent=11 // pred_region
          %s145 = ssub.s32 32, 32
          %146 = vsyncadd [#allocation3], %s145
          %s148 = sshll.u32 [#allocation2], 4
          %s149 = int_to_ptr.vmem [resolvable:$true] %s148
          %151 = dma.hbm_to_vmem [thread:$0]  %s0, 32, %s149, [#allocation3]
        $region16: #{tpu_custom_call.1} parent=11 // pred_fallthru
          _
        // Predicated region
        $region17: #{tpu_custom_call.1} parent=11 // pred_check
          %p152 = pneg %p70
        $region18: #{tpu_custom_call.1} parent=11 // pred_check_branch
          %154 = sbr.rel (%p152) target = $region20
        $region19: #{tpu_custom_call.1} parent=11 // pred_region
          _
        $region20: #{tpu_custom_call.1} parent=11 // pred_fallthru
          _
      $region12: #{tpu_custom_call.1} parent=5 // pred_fallthru
        _
      %p155 = scmp.lt.s32.totalorder %s16, 2
      // Predicated region
      $region21: #{tpu_custom_call.1} parent=5 // pred_check
        %p156 = pneg %p155
      $region22: #{tpu_custom_call.1} parent=5 // pred_check_branch
        %158 = sbr.rel (%p156) target = $region24
      $region23: #{tpu_custom_call.1} parent=5 // pred_region
        // Predicated region
        $region25: #{tpu_custom_call.1} parent=23 // pred_check
          %p159 = pneg %p92
        $region26: #{tpu_custom_call.1} parent=23 // pred_check_branch
          %161 = sbr.rel (%p159) target = $region28
        $region27: #{tpu_custom_call.1} parent=23 // pred_region
          %s162 = sand.u32 %s82, 1
          %s163 = scalar_lea.sflag [#allocation6], %s162
          %s164 = sand.u32 %s82, 1
          %s165 = smul.addr %s164, 8
          %s166 = scalar_lea.vmem [#allocation5], %s165
          %s168 = ssub.s32 128, 128
          %169 = vsyncadd %s163, %s168
          %s170 = sadd.s32 %s24, %s23
          %s171 = smul.addr %s170, 128
          %s172 = scalar_lea.hbm %s2, %s171
          %s174 = sshll.u32 %s166, 4
          %s175 = int_to_ptr.vmem [resolvable:$true] %s174
          %177 = dma.hbm_to_vmem [thread:$0]  %s172, 128, %s175, %s163
        $region28: #{tpu_custom_call.1} parent=23 // pred_fallthru
          _
      $region24: #{tpu_custom_call.1} parent=5 // pred_fallthru
        _
      %p178 = scmp.le.s32.totalorder 1, %s16
      %p179 = scmp.lt.s32.totalorder %s16, 3
      %p180 = pnand %p178, %p179
      %p181 = pneg %p180
      // Predicated region
      $region29: #{tpu_custom_call.1} parent=5 // pred_check
        _
      $region30: #{tpu_custom_call.1} parent=5 // pred_check_branch
        %183 = sbr.rel (%p180) target = $region32
      $region31: #{tpu_custom_call.1} parent=5 // pred_region
        %s184 = ssub.s32 %s16, 1
        // Predicated region
        $region33: #{tpu_custom_call.1} parent=31 // pred_check
          %p185 = pneg %p49
        $region34: #{tpu_custom_call.1} parent=31 // pred_check_branch
          %187 = sbr.rel (%p185) target = $region36
        $region35: #{tpu_custom_call.1} parent=31 // pred_region
          %188 = dma.done [#allocation3], 32
        $region36: #{tpu_custom_call.1} parent=31 // pred_fallthru
          _
        %s189 = sand.u32 %s85, 1
        %s190 = scalar_lea.sflag [#allocation6], %s189
        %s191 = sand.u32 %s85, 1
        %s192 = smul.addr %s191, 8
        %s193 = scalar_lea.vmem [#allocation5], %s192
        // Predicated region
        $region37: #{tpu_custom_call.1} parent=31 // pred_check
          %p194 = pneg %p98
        $region38: #{tpu_custom_call.1} parent=31 // pred_check_branch
          %196 = sbr.rel (%p194) target = $region40
        $region39: #{tpu_custom_call.1} parent=31 // pred_region
          %197 = dma.done %s190, 128
        $region40: #{tpu_custom_call.1} parent=31 // pred_fallthru
          _
        %p198 = pneg %p49
        %p199 = pneg %p46
        %p200 = pneg %p70
        %p201 = pneg %p67
        %s202 = sand.u32 %s85, 1
        %s203 = scalar_lea.sflag [#allocation6], %s202
        %s204 = sand.u32 %s85, 1
        %s205 = smul.addr %s204, 8
        %s206 = scalar_lea.vmem [#allocation5], %s205
        %p207 = pneg %p98
        %p208 = pneg %p95
        %p209 = pneg %p126
        %p210 = pneg %p123
        %s211 = sand.u32 %s113, 1
        %s212 = scalar_lea.sflag [#allocation4], %s211
        %s213 = sand.u32 %s113, 1
        %s214 = smul.addr %s213, 8
        %s215 = scalar_lea.vmem [#allocation7], %s214
        %v216 = vld [vmem:[%s193] sm:$0xff]
        %v217 = vmul.f32 %v216, %v216
        %218 = vadd.xlane.f32.xlu0 %v217
        %v219 = vpop.xlane.xlu0 %218
        %v220 = vmul.f32 %v219, 0.03125
        %v221 = vadd.f32 %v220, 1e-06
        %v222 = vrsqrt.pop %v221
        %s223 = scalar_lea.vmem [#allocation2], %s25
        %v224 = vld [vmem:[%s223] sm:$0x1]
        %s225 = scalar_lea.vmem %s1, %s25
        %v226 = vld [vmem:[%s225] sm:$0x1]
        %v227 = vmul.f32 %v216, %v222
        %v228 = vlaneseq
        %v229 = vshrl.u32 %v228, 7
        %v230 = vsub.s32 0, %v229
        %v231 = vrot.slane %v224, %v230
        %v232 = vmul.f32 %v227, %v231
        %v233 = vlaneseq
        %v234 = vshrl.u32 %v233, 7
        %v235 = vsub.s32 0, %v234
        %v236 = vrot.slane %v226, %v235
        %v237 = vadd.f32 %v232, %v236
        %238 = vst [vmem:[%s215] sm:$0xff] %v237
        %s239 = sand.u32 %s113, 1
        %s240 = scalar_lea.sflag [#allocation4], %s239
        %s241 = sand.u32 %s113, 1
        %s242 = smul.addr %s241, 8
        %s243 = scalar_lea.vmem [#allocation7], %s242
        // Predicated region
        $region41: #{tpu_custom_call.1} parent=31 // pred_check
          %p244 = pneg %p123
        $region42: #{tpu_custom_call.1} parent=31 // pred_check_branch
          %246 = sbr.rel (%p244) target = $region44
        $region43: #{tpu_custom_call.1} parent=31 // pred_region
          %s248 = ssub.s32 128, 128
          %249 = vsyncadd %s240, %s248
          %s250 = sadd.s32 %s26, %s25
          %s251 = smul.addr %s250, 128
          %s252 = scalar_lea.hbm %s3, %s251
          %s254 = sshll.u32 %s243, 4
          %s255 = int_to_ptr.vmem [resolvable:$true] %s254
          %257 = dma.vmem_to_hbm [thread:$0]  %s255, 128, %s252, %s240
        $region44: #{tpu_custom_call.1} parent=31 // pred_fallthru
          _
      $region32: #{tpu_custom_call.1} parent=5 // pred_fallthru
        _
      %p258 = scmp.le.s32.totalorder 2, %s16
      // Predicated region
      $region45: #{tpu_custom_call.1} parent=5 // pred_check
        %p259 = pneg %p258
      $region46: #{tpu_custom_call.1} parent=5 // pred_check_branch
        %261 = sbr.rel (%p259) target = $region48
      $region47: #{tpu_custom_call.1} parent=5 // pred_region
        %s262 = ssub.s32 %s16, 2
        // Predicated region
        $region49: #{tpu_custom_call.1} parent=47 // pred_check
          %p263 = pneg %p129
        $region50: #{tpu_custom_call.1} parent=47 // pred_check_branch
          %265 = sbr.rel (%p263) target = $region52
        $region51: #{tpu_custom_call.1} parent=47 // pred_region
          %s266 = sand.u32 %s114, 1
          %s267 = scalar_lea.sflag [#allocation4], %s266
          %s268 = sand.u32 %s114, 1
          %s269 = smul.addr %s268, 8
          %s270 = scalar_lea.vmem [#allocation7], %s269
          %271 = dma.done %s267, 128
        $region52: #{tpu_custom_call.1} parent=47 // pred_fallthru
          _
      $region48: #{tpu_custom_call.1} parent=5 // pred_fallthru
        _
    $region6: #{tpu_custom_call.1} parent=1 // loop_footer
      %s20 = sadd.s32 1, %s16
    $region7: #{tpu_custom_call.1} parent=1 // loop_footer_branch
      %15 = sbr.rel target = $region3
    $region8: #{tpu_custom_call.1} parent=1 // loop_exit
      _
    %272 = vsyncpa [#allocation3], 1
    %s273 = scalar_lea.sflag [#allocation3], 1
    %274 = vsyncpa %s273, 1
    %275 = vsyncpa [#allocation6], 1
    %s276 = scalar_lea.sflag [#allocation6], 1
    %277 = vsyncpa %s276, 1
    %278 = vsyncpa [#allocation4], 1
    %s279 = scalar_lea.sflag [#allocation4], 1
    %280 = vsyncpa %s279, 1

</llo_original>
